<compile_context>
chip_gen: v7x
topology: tpu7x:2x2x1
jax: 0.10.0
libtpu: 0.0.40
codegen_flags: <defaults>
</compile_context>

<pallas_src>
import functools

import jax
import jax.numpy as jnp
import numpy as np
from jax.experimental import pallas as pl
from jax.experimental.pallas import tpu as pltpu


# --------------------------------- kernel ------------------------------------
def _decoder_lstm_kernel(num_layers, hidden_dim, *refs):
    """Ref order (L = num_layers):
         inputs : x0, h_in (aliased), c_in (aliased), w_ih0, w_hh,
                  [w_ih_rest], b_stack, head_w_tile, head_b_tile
         outputs: head_out_tile, h_out, c_out
         scratch: h_last (VMEM, last-layer h reused by every vocab tile)
    """
    H = hidden_dim
    idx = 0
    x0_ref = refs[idx]; idx += 1                   # (B, E+1)
    h_in_ref = refs[idx]; idx += 1                 # (L, B, H)  aliased to h_out
    c_in_ref = refs[idx]; idx += 1                 # (L, B, H)  aliased to c_out
    w_ih0_ref = refs[idx]; idx += 1                # (E+1, 4H)
    w_hh_ref = refs[idx]; idx += 1                 # (L, H, 4H)
    w_ih_rest_ref = None
    if num_layers > 1:
        w_ih_rest_ref = refs[idx]; idx += 1        # (L-1, H, 4H)
    b_ref = refs[idx]                              # (L, 1, 4H)  f32
    head_w_ref = refs[idx + 1]                     # (H, tile_n)
    head_b_ref = refs[idx + 2]                     # (1, tile_n) f32
    idx += 3
    head_out_ref = refs[idx]                       # (B, tile_n) f32
    h_out_ref = refs[idx + 1]                      # (L, B, H)   f32
    c_out_ref = refs[idx + 2]                      # (L, B, H)   f32
    h_last_ref = refs[idx + 3]                     # (B, H) VMEM scratch

    wd = w_hh_ref.dtype                            # weight streaming dtype

    def cell_step(x_below, w_x, h_prev, w_h, b, c_prev):
        # Two accumulated MXU dots; f32 accumulation, f32 gate math.
        gates = (jnp.dot(x_below.astype(wd), w_x,
                         preferred_element_type=jnp.float32)
                 + jnp.dot(h_prev.astype(wd), w_h,
                           preferred_element_type=jnp.float32)
                 + b)                                          # (B, 4H) f32
        if H % 128 != 0:
            # Small H: 2 full-vreg EUP pushes + 1 lane-mask select instead of
            # 8 quarter-vreg activations.
            lane = jax.lax.broadcasted_iota(jnp.int32, gates.shape, 1)
            g_mask = (lane >= 2 * H) & (lane < 3 * H)
            act = jnp.where(g_mask, jnp.tanh(gates), jax.nn.sigmoid(gates))
            i_g = act[:, 0 * H:1 * H]
            f_g = act[:, 1 * H:2 * H]
            g_g = act[:, 2 * H:3 * H]
            o_g = act[:, 3 * H:4 * H]
        else:
            i_g = jax.nn.sigmoid(gates[:, 0 * H:1 * H])
            f_g = jax.nn.sigmoid(gates[:, 1 * H:2 * H])
            g_g = jnp.tanh(gates[:, 2 * H:3 * H])
            o_g = jax.nn.sigmoid(gates[:, 3 * H:4 * H])
        c_new = f_g * c_prev + i_g * g_g
        h_new = o_g * jnp.tanh(c_new)
        return h_new, c_new

    # LSTM stack runs once (grid step 0); result stashed to VMEM scratch.
    @pl.when(pl.program_id(0) == 0)
    def _run_lstm():
        # layer 0: input = [embedding | delta] (pre-packed in wrapper)
        h_new, c_new = cell_step(x0_ref[...], w_ih0_ref[...],
                                 h_in_ref[0], w_hh_ref[0], b_ref[0], c_in_ref[0])
        h_out_ref[0] = h_new
        c_out_ref[0] = c_new
        # layers 1..L-1 (inter-layer dropout is identity, eval semantics)
        for l in range(1, num_layers):
            h_new, c_new = cell_step(h_new, w_ih_rest_ref[l - 1],
                                     h_in_ref[l], w_hh_ref[l], b_ref[l],
                                     c_in_ref[l])
            h_out_ref[l] = h_new
            c_out_ref[l] = c_new
        h_last_ref[...] = h_new.astype(h_last_ref.dtype)

    # Fused heads, one lane-dense tile per grid step:
    #   cols [0:V] = fc_activity, [V] = fc_time, rest zero-pad.
    head_out_ref[...] = (
        jnp.dot(h_last_ref[...], head_w_ref[...],
                preferred_element_type=jnp.float32)
        + head_b_ref[...])


# ----------------------- one-time parameter preparation ----------------------
def prepare_params(params, *, hidden_dim, num_layers, vocab_size,
                   param_dtype=jnp.bfloat16):
    """Hoisted out of the decode step: pack PyTorch-shaped params into
    kernel-friendly, pre-transposed / fused operands (done once).
    `param_dtype` controls the weight streaming dtype (bf16 default)."""
    H = hidden_dim
    V = vocab_size
    prep = {"embedding": params["embedding"]}      # gather table stays f32

    w_ih0, w_hh0, b_ih0, b_hh0 = params["lstm"][0]
    prep["w_ih0"] = w_ih0.T.astype(param_dtype)                   # (E+1, 4H)
    w_hh = [w_hh0.T]
    biases = [(b_ih0 + b_hh0)[None, :]]
    w_ih_rest = []
    for l in range(1, num_layers):
        w_ih, w_hh_l, b_ih, b_hh = params["lstm"][l]
        w_ih_rest.append(w_ih.T)                                  # (H, 4H)
        w_hh.append(w_hh_l.T)                                     # (H, 4H)
        biases.append((b_ih + b_hh)[None, :])
    prep["w_hh"] = jnp.stack(w_hh).astype(param_dtype)            # (L, H, 4H)
    if num_layers > 1:
        prep["w_ih_rest"] = jnp.stack(w_ih_rest).astype(param_dtype)  # (L-1,H,4H)
    prep["b_stack"] = jnp.stack(biases).astype(jnp.float32)       # (L, 1, 4H)

    # Fused, 128-lane-padded output heads.
    v_pad = ((V + 1 + 127) // 128) * 128
    head_w = jnp.zeros((H, v_pad), jnp.float32)
    head_w = head_w.at[:, :V].set(params["fc_activity_w"].T)
    head_w = head_w.at[:, V:V + 1].set(params["fc_time_w"].T)
    head_b = jnp.zeros((1, v_pad), jnp.float32)
    head_b = head_b.at[:, :V].set(params["fc_activity_b"][None, :])
    head_b = head_b.at[:, V:V + 1].set(params["fc_time_b"][None, :])
    prep["head_w"] = head_w.astype(param_dtype)                   # (H, Vpad)
    prep["head_b"] = head_b                                       # (1, Vpad) f32
    return prep


# ------------------------------ per-step forward ------------------------------
def _decoder_lstm_forward_impl(prep, input_token, input_delta, hidden, cell, *,
                               hidden_dim, num_layers, vocab_size,
                               vocab_tile=512):
    B = input_token.shape[0]
    H = hidden_dim
    L = num_layers
    V = vocab_size
    Vpad = prep["head_w"].shape[1]

    # Pick the biggest multiple-of-128 tile <= vocab_tile that divides Vpad.
    tile_n = min(vocab_tile, Vpad)
    while Vpad % tile_n != 0:
        tile_n -= 128
    num_tiles = Vpad // tile_n

    # Plain-JAX glue (fused into this jit): embedding gather + delta packing.
    # Embedding dropout is identity (eval-mode forward semantics).
    emb = prep["embedding"][input_token].astype(jnp.float32)      # (B, E)
    delta = input_delta.astype(jnp.float32)[:, None]              # (B, 1)
    x0 = jnp.concatenate([emb, delta], axis=-1)                   # (B, E+1)

    inputs = [x0, hidden, cell, prep["w_ih0"], prep["w_hh"]]
    if L > 1:
        inputs.append(prep["w_ih_rest"])
    inputs += [prep["b_stack"], prep["head_w"], prep["head_b"]]

    def resident(a):
        # Whole-array block, constant index_map: DMA'd once per call.
        zeros = (0,) * a.ndim
        return pl.BlockSpec(a.shape, lambda j, _z=zeros: _z)

    in_specs = [resident(a) for a in inputs]
    # Head weight/bias stream tile-by-tile over the vocab grid axis.
    in_specs[-2] = pl.BlockSpec((H, tile_n), lambda j: (0, j))
    in_specs[-1] = pl.BlockSpec((1, tile_n), lambda j: (0, j))

    out_shape = (
        jax.ShapeDtypeStruct((B, Vpad), jnp.float32),               # fused heads
        jax.ShapeDtypeStruct((L, B, H), jnp.float32),               # h state
        jax.ShapeDtypeStruct((L, B, H), jnp.float32),               # c state
    )
    out_specs = (
        pl.BlockSpec((B, tile_n), lambda j: (0, j)),                # lane-dense
        pl.BlockSpec((L, B, H), lambda j: (0, 0, 0)),
        pl.BlockSpec((L, B, H), lambda j: (0, 0, 0)),
    )

    kernel = functools.partial(_decoder_lstm_kernel, L, H)
    head_out, h_out, c_out = pl.pallas_call(
        kernel,
        grid=(num_tiles,),
        out_shape=out_shape,
        in_specs=in_specs,
        out_specs=out_specs,
        scratch_shapes=[pltpu.VMEM((B, H), prep["head_w"].dtype)],
        # state round-trips in place (no fresh HBM state buffers per step)
        input_output_aliases={1: 1, 2: 2},
        compiler_params=pltpu.CompilerParams(
            dimension_semantics=("arbitrary",),
            vmem_limit_bytes=64 * 1024 * 1024),
    )(*inputs)

    logits = head_out[:, :V]
    time_pred = head_out[:, V]
    return logits, time_pred, h_out, c_out


decoder_lstm_forward = jax.jit(
    _decoder_lstm_forward_impl,
    static_argnames=("hidden_dim", "num_layers", "vocab_size", "vocab_tile"))


# -------------------------- synthetic PyTorch-shaped params ------------------
def init_params(key, vocab_size, embedding_dim, hidden_dim, num_layers):
    keys = jax.random.split(key, 4 + 4 * num_layers)
    p = {}
    p["embedding"] = 0.1 * jax.random.normal(
        keys[0], (vocab_size, embedding_dim), jnp.float32)
    p["lstm"] = []
    k = 1.0 / np.sqrt(hidden_dim)
    for l in range(num_layers):
        in_dim = embedding_dim + 1 if l == 0 else hidden_dim
        kk = keys[4 + 4 * l: 4 + 4 * (l + 1)]
        w_ih = jax.random.uniform(kk[0], (4 * hidden_dim, in_dim), jnp.float32, -k, k)
        w_hh = jax.random.uniform(kk[1], (4 * hidden_dim, hidden_dim), jnp.float32, -k, k)
        b_ih = jax.random.uniform(kk[2], (4 * hidden_dim,), jnp.float32, -k, k)
        b_hh = jax.random.uniform(kk[3], (4 * hidden_dim,), jnp.float32, -k, k)
        p["lstm"].append((w_ih, w_hh, b_ih, b_hh))
    kf = 1.0 / np.sqrt(hidden_dim)
    p["fc_activity_w"] = jax.random.uniform(
        keys[1], (vocab_size, hidden_dim), jnp.float32, -kf, kf)
    p["fc_activity_b"] = jax.random.uniform(keys[2], (vocab_size,), jnp.float32, -kf, kf)
    p["fc_time_w"] = jax.random.uniform(keys[3], (1, hidden_dim), jnp.float32, -kf, kf)
    p["fc_time_b"] = jnp.zeros((1,), jnp.float32)
    return p


# -------------------------- pure-JAX reference -------------------------------
def ref_forward(params, input_token, input_delta, hidden, cell, *, hidden_dim):
    H = hidden_dim
    emb = params["embedding"][input_token]
    x = jnp.concatenate([emb, input_delta[:, None]], axis=-1)
    h_list, c_list = [], []
    layer_in = x
    for l, (w_ih, w_hh, b_ih, b_hh) in enumerate(params["lstm"]):
        gates = layer_in @ w_ih.T + hidden[l] @ w_hh.T + b_ih + b_hh
        i = jax.nn.sigmoid(gates[:, 0 * H:1 * H])
        f = jax.nn.sigmoid(gates[:, 1 * H:2 * H])
        g = jnp.tanh(gates[:, 2 * H:3 * H])
        o = jax.nn.sigmoid(gates[:, 3 * H:4 * H])
        c_new = f * cell[l] + i * g
        h_new = o * jnp.tanh(c_new)
        h_list.append(h_new)
        c_list.append(c_new)
        layer_in = h_new
    logits = layer_in @ params["fc_activity_w"].T + params["fc_activity_b"]
    t = (layer_in @ params["fc_time_w"].T + params["fc_time_b"])[:, 0]
    return logits, t, jnp.stack(h_list), jnp.stack(c_list)


if __name__ == "__main__":
    VOCAB = 16
    EMB = 31           # embedding_dim; LSTM layer-0 input size = EMB + 1 = 32
    HID = 32
    LAYERS = 2
    B = 8

    key = jax.random.PRNGKey(0)
    kp, kt, kd, kh, kc = jax.random.split(key, 5)

    params = init_params(kp, VOCAB, EMB, HID, LAYERS)

    input_token = jax.random.randint(kt, (B,), 0, VOCAB, dtype=jnp.int32)
    input_delta = jax.random.uniform(kd, (B,), jnp.float32)
    hidden = 0.1 * jax.random.normal(kh, (LAYERS, B, HID), jnp.float32)
    cell = 0.1 * jax.random.normal(kc, (LAYERS, B, HID), jnp.float32)

    r_logits, r_t, r_h, r_c = ref_forward(
        params, input_token, input_delta, hidden, cell, hidden_dim=HID)

    # --- exact-parity run: f32 weight streaming ------------------------------
    prep_f32 = prepare_params(params, hidden_dim=HID, num_layers=LAYERS,
                              vocab_size=VOCAB, param_dtype=jnp.float32)
    jax.block_until_ready(prep_f32)
    logits, t_pred, h_out, c_out = decoder_lstm_forward(
        prep_f32, input_token, input_delta, hidden, cell,
        hidden_dim=HID, num_layers=LAYERS, vocab_size=VOCAB)
    jax.block_until_ready((logits, t_pred, h_out, c_out))

    assert logits.shape == (B, VOCAB) and t_pred.shape == (B,)
    assert h_out.shape == (LAYERS, B, HID) and c_out.shape == (LAYERS, B, HID)
    np.testing.assert_allclose(np.asarray(logits), np.asarray(r_logits), atol=1e-5, rtol=1e-5)
    np.testing.assert_allclose(np.asarray(t_pred), np.asarray(r_t), atol=1e-5, rtol=1e-5)
    np.testing.assert_allclose(np.asarray(h_out), np.asarray(r_h), atol=1e-5, rtol=1e-5)
    np.testing.assert_allclose(np.asarray(c_out), np.asarray(r_c), atol=1e-5, rtol=1e-5)

    # --- production path: bf16 weight streaming (relaxed tolerance) ----------
    prep_bf16 = prepare_params(params, hidden_dim=HID, num_layers=LAYERS,
                               vocab_size=VOCAB, param_dtype=jnp.bfloat16)
    jax.block_until_ready(prep_bf16)
    logits_b, t_pred_b, h_out_b, c_out_b = decoder_lstm_forward(
        prep_bf16, input_token, input_delta, hidden, cell,
        hidden_dim=HID, num_layers=LAYERS, vocab_size=VOCAB)
    jax.block_until_ready((logits_b, t_pred_b, h_out_b, c_out_b))

    np.testing.assert_allclose(np.asarray(logits_b), np.asarray(r_logits), atol=3e-2, rtol=3e-2)
    np.testing.assert_allclose(np.asarray(t_pred_b), np.asarray(r_t), atol=3e-2, rtol=3e-2)
    np.testing.assert_allclose(np.asarray(h_out_b), np.asarray(r_h), atol=3e-2, rtol=3e-2)
    np.testing.assert_allclose(np.asarray(c_out_b), np.asarray(r_c), atol=3e-2, rtol=3e-2)

    print("KERNEL_OK")
</pallas_src>

<mosaic_0001>
module attributes {stable_mosaic.version = 11 : i64} {
  func.func @_decoder_lstm_kernel(%arg0: i32, %arg1: memref<8x32xf32, #tpu.memory_space<vmem>>, %arg2: memref<2x8x32xf32, #tpu.memory_space<vmem>>, %arg3: memref<2x8x32xf32, #tpu.memory_space<vmem>>, %arg4: memref<32x128xf32, #tpu.memory_space<vmem>>, %arg5: memref<2x32x128xf32, #tpu.memory_space<vmem>>, %arg6: memref<1x32x128xf32, #tpu.memory_space<vmem>>, %arg7: memref<2x1x128xf32, #tpu.memory_space<vmem>>, %arg8: memref<32x128xf32, #tpu.memory_space<vmem>>, %arg9: memref<1x128xf32, #tpu.memory_space<vmem>>, %arg10: memref<8x128xf32, #tpu.memory_space<vmem>>, %arg11: memref<2x8x32xf32, #tpu.memory_space<vmem>>, %arg12: memref<2x8x32xf32, #tpu.memory_space<vmem>>, %arg13: memref<8x32xf32, #tpu.memory_space<vmem>>) attributes {dimension_semantics = [#tpu.dimension_semantics<arbitrary>], iteration_bounds = array<i64: 1>, scalar_prefetch = 0 : i64, scratch_operands = 1 : i64, tpu.core_type = #tpu.core_type<tc>, window_params = [{pipeline_mode = #tpu.pipeline_mode<synchronous>, transform_indices = @transform_0, window_bounds = array<i64: 8, 32>}, {pipeline_mode = #tpu.pipeline_mode<synchronous>, transform_indices = @transform_1, window_bounds = array<i64: 2, 8, 32>}, {pipeline_mode = #tpu.pipeline_mode<synchronous>, transform_indices = @transform_2, window_bounds = array<i64: 2, 8, 32>}, {pipeline_mode = #tpu.pipeline_mode<synchronous>, transform_indices = @transform_3, window_bounds = array<i64: 32, 128>}, {pipeline_mode = #tpu.pipeline_mode<synchronous>, transform_indices = @transform_4, window_bounds = array<i64: 2, 32, 128>}, {pipeline_mode = #tpu.pipeline_mode<synchronous>, transform_indices = @transform_5, window_bounds = array<i64: 1, 32, 128>}, {pipeline_mode = #tpu.pipeline_mode<synchronous>, transform_indices = @transform_6, window_bounds = array<i64: 2, 1, 128>}, {transform_indices = @transform_7, window_bounds = array<i64: 32, 128>}, {transform_indices = @transform_8, window_bounds = array<i64: 1, 128>}, {transform_indices = @transform_9, window_bounds = array<i64: 8, 128>}, {pipeline_mode = #tpu.pipeline_mode<synchronous>, transform_indices = @transform_10, window_bounds = array<i64: 2, 8, 32>}, {pipeline_mode = #tpu.pipeline_mode<synchronous>, transform_indices = @transform_11, window_bounds = array<i64: 2, 8, 32>}]} {
    %c0_i32 = arith.constant 0 : i32
    %0 = arith.cmpi eq, %arg0, %c0_i32 : i32
    %1 = arith.extui %0 : i1 to i32
    %c0_i32_0 = arith.constant 0 : i32
    %2 = arith.cmpi ne, %1, %c0_i32_0 : i32
    scf.if %2 {
      %c0_8 = arith.constant 0 : index
      %c0_9 = arith.constant 0 : index
      %10 = vector.load %arg1[%c0_8, %c0_9] : memref<8x32xf32, #tpu.memory_space<vmem>>, vector<8x32xf32>
      %c0_10 = arith.constant 0 : index
      %c0_11 = arith.constant 0 : index
      %11 = vector.load %arg4[%c0_10, %c0_11] : memref<32x128xf32, #tpu.memory_space<vmem>>, vector<32x128xf32>
      %c0_12 = arith.constant 0 : index
      %c0_13 = arith.constant 0 : index
      %c0_14 = arith.constant 0 : index
      %12 = vector.load %arg2[%c0_12, %c0_13, %c0_14] : memref<2x8x32xf32, #tpu.memory_space<vmem>>, vector<1x8x32xf32>
      %13 = vector.shape_cast %12 : vector<1x8x32xf32> to vector<8x32xf32>
      %c0_15 = arith.constant 0 : index
      %c0_16 = arith.constant 0 : index
      %c0_17 = arith.constant 0 : index
      %14 = vector.load %arg5[%c0_15, %c0_16, %c0_17] : memref<2x32x128xf32, #tpu.memory_space<vmem>>, vector<1x32x128xf32>
      %15 = vector.shape_cast %14 : vector<1x32x128xf32> to vector<32x128xf32>
      %c0_18 = arith.constant 0 : index
      %c0_19 = arith.constant 0 : index
      %c0_20 = arith.constant 0 : index
      %16 = vector.load %arg7[%c0_18, %c0_19, %c0_20] : memref<2x1x128xf32, #tpu.memory_space<vmem>>, vector<1x1x128xf32>
      %17 = vector.shape_cast %16 : vector<1x1x128xf32> to vector<1x128xf32>
      %c0_21 = arith.constant 0 : index
      %c0_22 = arith.constant 0 : index
      %c0_23 = arith.constant 0 : index
      %18 = vector.load %arg3[%c0_21, %c0_22, %c0_23] : memref<2x8x32xf32, #tpu.memory_space<vmem>>, vector<1x8x32xf32>
      %19 = vector.shape_cast %18 : vector<1x8x32xf32> to vector<8x32xf32>
      %cst_24 = arith.constant dense<0.000000e+00> : vector<8x128xf32>
      %20 = tpu.matmul %10, %11, %cst_24 {dimension_numbers = #tpu.dot_dimension_numbers<[1], [0], [0], [1], [0, 0, 1, 1], [], []>} : vector<8x32xf32>, vector<32x128xf32>, vector<8x128xf32> -> vector<8x128xf32>
      %cst_25 = arith.constant dense<0.000000e+00> : vector<8x128xf32>
      %21 = tpu.matmul %13, %15, %cst_25 {dimension_numbers = #tpu.dot_dimension_numbers<[1], [0], [0], [1], [0, 0, 1, 1], [], []>} : vector<8x32xf32>, vector<32x128xf32>, vector<8x128xf32> -> vector<8x128xf32>
      %22 = arith.addf %20, %21 : vector<8x128xf32>
      %23 = vector.broadcast %17 : vector<1x128xf32> to vector<8x128xf32>
      %24 = arith.addf %22, %23 : vector<8x128xf32>
      %25 = tpu.iota {dimensions = array<i32: 1>} : vector<8x128xi32>
      %c64_i32 = arith.constant 64 : i32
      %26 = vector.broadcast %c64_i32 : i32 to vector<8x128xi32>
      %27 = arith.cmpi sge, %25, %26 : vector<8x128xi32>
      %c96_i32 = arith.constant 96 : i32
      %28 = vector.broadcast %c96_i32 : i32 to vector<8x128xi32>
      %29 = arith.cmpi slt, %25, %28 : vector<8x128xi32>
      %30 = arith.andi %27, %29 : vector<8x128xi1>
      %31 = math.tanh %24 : vector<8x128xf32>
      %32 = arith.negf %24 : vector<8x128xf32>
      %33 = math.exp %32 : vector<8x128xf32>
      %cst_26 = arith.constant 1.000000e+00 : f32
      %34 = vector.broadcast %cst_26 : f32 to vector<8x128xf32>
      %35 = arith.addf %34, %33 : vector<8x128xf32>
      %36 = arith.divf %34, %35 : vector<8x128xf32>
      %37 = arith.select %30, %31, %36 : vector<8x128xi1>, vector<8x128xf32>
      %38 = vector.extract_strided_slice %37 {offsets = [0, 0], sizes = [8, 32], strides = [1, 1]} : vector<8x128xf32> to vector<8x32xf32>
      %39 = vector.extract_strided_slice %37 {offsets = [0, 32], sizes = [8, 32], strides = [1, 1]} : vector<8x128xf32> to vector<8x32xf32>
      %40 = vector.extract_strided_slice %37 {offsets = [0, 64], sizes = [8, 32], strides = [1, 1]} : vector<8x128xf32> to vector<8x32xf32>
      %41 = vector.extract_strided_slice %37 {offsets = [0, 96], sizes = [8, 32], strides = [1, 1]} : vector<8x128xf32> to vector<8x32xf32>
      %42 = arith.mulf %39, %19 : vector<8x32xf32>
      %43 = arith.mulf %38, %40 : vector<8x32xf32>
      %44 = arith.addf %42, %43 : vector<8x32xf32>
      %45 = math.tanh %44 : vector<8x32xf32>
      %46 = arith.mulf %41, %45 : vector<8x32xf32>
      %c0_27 = arith.constant 0 : index
      %c0_28 = arith.constant 0 : index
      %c0_29 = arith.constant 0 : index
      %47 = vector.load %arg11[%c0_27, %c0_28, %c0_29] : memref<2x8x32xf32, #tpu.memory_space<vmem>>, vector<1x8x32xf32>
      %48 = vector.shape_cast %47 : vector<1x8x32xf32> to vector<8x32xf32>
      %49 = vector.shape_cast %46 : vector<8x32xf32> to vector<1x8x32xf32>
      tpu.vector_store %arg11[%c0_27, %c0_28, %c0_29], %49 {strides = array<i32>} : memref<2x8x32xf32, #tpu.memory_space<vmem>>, vector<1x8x32xf32>,
      %c0_30 = arith.constant 0 : index
      %c0_31 = arith.constant 0 : index
      %c0_32 = arith.constant 0 : index
      %50 = vector.load %arg12[%c0_30, %c0_31, %c0_32] : memref<2x8x32xf32, #tpu.memory_space<vmem>>, vector<1x8x32xf32>
      %51 = vector.shape_cast %50 : vector<1x8x32xf32> to vector<8x32xf32>
      %52 = vector.shape_cast %44 : vector<8x32xf32> to vector<1x8x32xf32>
      tpu.vector_store %arg12[%c0_30, %c0_31, %c0_32], %52 {strides = array<i32>} : memref<2x8x32xf32, #tpu.memory_space<vmem>>, vector<1x8x32xf32>,
      %c0_33 = arith.constant 0 : index
      %c0_34 = arith.constant 0 : index
      %c0_35 = arith.constant 0 : index
      %53 = vector.load %arg6[%c0_33, %c0_34, %c0_35] : memref<1x32x128xf32, #tpu.memory_space<vmem>>, vector<1x32x128xf32>
      %54 = vector.shape_cast %53 : vector<1x32x128xf32> to vector<32x128xf32>
      %c1 = arith.constant 1 : index
      %c0_36 = arith.constant 0 : index
      %c0_37 = arith.constant 0 : index
      %55 = vector.load %arg2[%c1, %c0_36, %c0_37] : memref<2x8x32xf32, #tpu.memory_space<vmem>>, vector<1x8x32xf32>
      %56 = vector.shape_cast %55 : vector<1x8x32xf32> to vector<8x32xf32>
      %c1_38 = arith.constant 1 : index
      %c0_39 = arith.constant 0 : index
      %c0_40 = arith.constant 0 : index
      %57 = vector.load %arg5[%c1_38, %c0_39, %c0_40] : memref<2x32x128xf32, #tpu.memory_space<vmem>>, vector<1x32x128xf32>
      %58 = vector.shape_cast %57 : vector<1x32x128xf32> to vector<32x128xf32>
      %c1_41 = arith.constant 1 : index
      %c0_42 = arith.constant 0 : index
      %c0_43 = arith.constant 0 : index
      %59 = vector.load %arg7[%c1_41, %c0_42, %c0_43] : memref<2x1x128xf32, #tpu.memory_space<vmem>>, vector<1x1x128xf32>
      %60 = vector.shape_cast %59 : vector<1x1x128xf32> to vector<1x128xf32>
      %c1_44 = arith.constant 1 : index
      %c0_45 = arith.constant 0 : index
      %c0_46 = arith.constant 0 : index
      %61 = vector.load %arg3[%c1_44, %c0_45, %c0_46] : memref<2x8x32xf32, #tpu.memory_space<vmem>>, vector<1x8x32xf32>
      %62 = vector.shape_cast %61 : vector<1x8x32xf32> to vector<8x32xf32>
      %cst_47 = arith.constant dense<0.000000e+00> : vector<8x128xf32>
      %63 = tpu.matmul %46, %54, %cst_47 {dimension_numbers = #tpu.dot_dimension_numbers<[1], [0], [0], [1], [0, 0, 1, 1], [], []>} : vector<8x32xf32>, vector<32x128xf32>, vector<8x128xf32> -> vector<8x128xf32>
      %cst_48 = arith.constant dense<0.000000e+00> : vector<8x128xf32>
      %64 = tpu.matmul %56, %58, %cst_48 {dimension_numbers = #tpu.dot_dimension_numbers<[1], [0], [0], [1], [0, 0, 1, 1], [], []>} : vector<8x32xf32>, vector<32x128xf32>, vector<8x128xf32> -> vector<8x128xf32>
      %65 = arith.addf %63, %64 : vector<8x128xf32>
      %66 = vector.broadcast %60 : vector<1x128xf32> to vector<8x128xf32>
      %67 = arith.addf %65, %66 : vector<8x128xf32>
      %68 = tpu.iota {dimensions = array<i32: 1>} : vector<8x128xi32>
      %c64_i32_49 = arith.constant 64 : i32
      %69 = vector.broadcast %c64_i32_49 : i32 to vector<8x128xi32>
      %70 = arith.cmpi sge, %68, %69 : vector<8x128xi32>
      %c96_i32_50 = arith.constant 96 : i32
      %71 = vector.broadcast %c96_i32_50 : i32 to vector<8x128xi32>
      %72 = arith.cmpi slt, %68, %71 : vector<8x128xi32>
      %73 = arith.andi %70, %72 : vector<8x128xi1>
      %74 = math.tanh %67 : vector<8x128xf32>
      %75 = arith.negf %67 : vector<8x128xf32>
      %76 = math.exp %75 : vector<8x128xf32>
      %cst_51 = arith.constant 1.000000e+00 : f32
      %77 = vector.broadcast %cst_51 : f32 to vector<8x128xf32>
      %78 = arith.addf %77, %76 : vector<8x128xf32>
      %79 = arith.divf %77, %78 : vector<8x128xf32>
      %80 = arith.select %73, %74, %79 : vector<8x128xi1>, vector<8x128xf32>
      %81 = vector.extract_strided_slice %80 {offsets = [0, 0], sizes = [8, 32], strides = [1, 1]} : vector<8x128xf32> to vector<8x32xf32>
      %82 = vector.extract_strided_slice %80 {offsets = [0, 32], sizes = [8, 32], strides = [1, 1]} : vector<8x128xf32> to vector<8x32xf32>
      %83 = vector.extract_strided_slice %80 {offsets = [0, 64], sizes = [8, 32], strides = [1, 1]} : vector<8x128xf32> to vector<8x32xf32>
      %84 = vector.extract_strided_slice %80 {offsets = [0, 96], sizes = [8, 32], strides = [1, 1]} : vector<8x128xf32> to vector<8x32xf32>
      %85 = arith.mulf %82, %62 : vector<8x32xf32>
      %86 = arith.mulf %81, %83 : vector<8x32xf32>
      %87 = arith.addf %85, %86 : vector<8x32xf32>
      %88 = math.tanh %87 : vector<8x32xf32>
      %89 = arith.mulf %84, %88 : vector<8x32xf32>
      %c1_52 = arith.constant 1 : index
      %c0_53 = arith.constant 0 : index
      %c0_54 = arith.constant 0 : index
      %90 = vector.load %arg11[%c1_52, %c0_53, %c0_54] : memref<2x8x32xf32, #tpu.memory_space<vmem>>, vector<1x8x32xf32>
      %91 = vector.shape_cast %90 : vector<1x8x32xf32> to vector<8x32xf32>
      %92 = vector.shape_cast %89 : vector<8x32xf32> to vector<1x8x32xf32>
      tpu.vector_store %arg11[%c1_52, %c0_53, %c0_54], %92 {strides = array<i32>} : memref<2x8x32xf32, #tpu.memory_space<vmem>>, vector<1x8x32xf32>,
      %c1_55 = arith.constant 1 : index
      %c0_56 = arith.constant 0 : index
      %c0_57 = arith.constant 0 : index
      %93 = vector.load %arg12[%c1_55, %c0_56, %c0_57] : memref<2x8x32xf32, #tpu.memory_space<vmem>>, vector<1x8x32xf32>
      %94 = vector.shape_cast %93 : vector<1x8x32xf32> to vector<8x32xf32>
      %95 = vector.shape_cast %87 : vector<8x32xf32> to vector<1x8x32xf32>
      tpu.vector_store %arg12[%c1_55, %c0_56, %c0_57], %95 {strides = array<i32>} : memref<2x8x32xf32, #tpu.memory_space<vmem>>, vector<1x8x32xf32>,
      %c0_58 = arith.constant 0 : index
      %c0_59 = arith.constant 0 : index
      %96 = vector.load %arg13[%c0_58, %c0_59] : memref<8x32xf32, #tpu.memory_space<vmem>>, vector<8x32xf32>
      tpu.vector_store %arg13[%c0_58, %c0_59], %89 {strides = array<i32>} : memref<8x32xf32, #tpu.memory_space<vmem>>, vector<8x32xf32>,
    } else {
    }
    %c0 = arith.constant 0 : index
    %c0_1 = arith.constant 0 : index
    %3 = vector.load %arg13[%c0, %c0_1] : memref<8x32xf32, #tpu.memory_space<vmem>>, vector<8x32xf32>
    %c0_2 = arith.constant 0 : index
    %c0_3 = arith.constant 0 : index
    %4 = vector.load %arg8[%c0_2, %c0_3] : memref<32x128xf32, #tpu.memory_space<vmem>>, vector<32x128xf32>
    %cst = arith.constant dense<0.000000e+00> : vector<8x128xf32>
    %5 = tpu.matmul %3, %4, %cst {dimension_numbers = #tpu.dot_dimension_numbers<[1], [0], [0], [1], [0, 0, 1, 1], [], []>} : vector<8x32xf32>, vector<32x128xf32>, vector<8x128xf32> -> vector<8x128xf32>
    %c0_4 = arith.constant 0 : index
    %c0_5 = arith.constant 0 : index
    %6 = vector.load %arg9[%c0_4, %c0_5] : memref<1x128xf32, #tpu.memory_space<vmem>>, vector<1x128xf32>
    %7 = vector.broadcast %6 : vector<1x128xf32> to vector<8x128xf32>
    %8 = arith.addf %5, %7 : vector<8x128xf32>
    %c0_6 = arith.constant 0 : index
    %c0_7 = arith.constant 0 : index
    %9 = vector.load %arg10[%c0_6, %c0_7] : memref<8x128xf32, #tpu.memory_space<vmem>>, vector<8x128xf32>
    tpu.vector_store %arg10[%c0_6, %c0_7], %8 {strides = array<i32>} : memref<8x128xf32, #tpu.memory_space<vmem>>, vector<8x128xf32>,
    return
  }
  func.func @transform_0(%arg0: i32) -> (i32, i32) {
    %c0_i32 = arith.constant 0 : i32
    %c0_i32_0 = arith.constant 0 : i32
    %c0_i32_1 = arith.constant 0 : i32
    return %c0_i32, %c0_i32_0 : i32, i32
  }
  func.func @transform_1(%arg0: i32) -> (i32, i32, i32) {
    %c0_i32 = arith.constant 0 : i32
    %c0_i32_0 = arith.constant 0 : i32
    %c0_i32_1 = arith.constant 0 : i32
    %c0_i32_2 = arith.constant 0 : i32
    return %c0_i32, %c0_i32_0, %c0_i32_1 : i32, i32, i32
  }
  func.func @transform_2(%arg0: i32) -> (i32, i32, i32) {
    %c0_i32 = arith.constant 0 : i32
    %c0_i32_0 = arith.constant 0 : i32
    %c0_i32_1 = arith.constant 0 : i32
    %c0_i32_2 = arith.constant 0 : i32
    return %c0_i32, %c0_i32_0, %c0_i32_1 : i32, i32, i32
  }
  func.func @transform_3(%arg0: i32) -> (i32, i32) {
    %c0_i32 = arith.constant 0 : i32
    %c0_i32_0 = arith.constant 0 : i32
    %c0_i32_1 = arith.constant 0 : i32
    return %c0_i32, %c0_i32_0 : i32, i32
  }
  func.func @transform_4(%arg0: i32) -> (i32, i32, i32) {
    %c0_i32 = arith.constant 0 : i32
    %c0_i32_0 = arith.constant 0 : i32
    %c0_i32_1 = arith.constant 0 : i32
    %c0_i32_2 = arith.constant 0 : i32
    return %c0_i32, %c0_i32_0, %c0_i32_1 : i32, i32, i32
  }
  func.func @transform_5(%arg0: i32) -> (i32, i32, i32) {
    %c0_i32 = arith.constant 0 : i32
    %c0_i32_0 = arith.constant 0 : i32
    %c0_i32_1 = arith.constant 0 : i32
    %c0_i32_2 = arith.constant 0 : i32
    return %c0_i32, %c0_i32_0, %c0_i32_1 : i32, i32, i32
  }
  func.func @transform_6(%arg0: i32) -> (i32, i32, i32) {
    %c0_i32 = arith.constant 0 : i32
    %c0_i32_0 = arith.constant 0 : i32
    %c0_i32_1 = arith.constant 0 : i32
    %c0_i32_2 = arith.constant 0 : i32
    return %c0_i32, %c0_i32_0, %c0_i32_1 : i32, i32, i32
  }
  func.func @transform_7(%arg0: i32) -> (i32, i32) {
    %c0_i32 = arith.constant 0 : i32
    %c0_i32_0 = arith.constant 0 : i32
    return %c0_i32, %arg0 : i32, i32
  }
  func.func @transform_8(%arg0: i32) -> (i32, i32) {
    %c0_i32 = arith.constant 0 : i32
    %c0_i32_0 = arith.constant 0 : i32
    return %c0_i32, %arg0 : i32, i32
  }
  func.func @transform_9(%arg0: i32) -> (i32, i32) {
    %c0_i32 = arith.constant 0 : i32
    %c0_i32_0 = arith.constant 0 : i32
    return %c0_i32, %arg0 : i32, i32
  }
  func.func @transform_10(%arg0: i32) -> (i32, i32, i32) {
    %c0_i32 = arith.constant 0 : i32
    %c0_i32_0 = arith.constant 0 : i32
    %c0_i32_1 = arith.constant 0 : i32
    %c0_i32_2 = arith.constant 0 : i32
    return %c0_i32, %c0_i32_0, %c0_i32_1 : i32, i32, i32
  }
  func.func @transform_11(%arg0: i32) -> (i32, i32, i32) {
    %c0_i32 = arith.constant 0 : i32
    %c0_i32_0 = arith.constant 0 : i32
    %c0_i32_1 = arith.constant 0 : i32
    %c0_i32_2 = arith.constant 0 : i32
    return %c0_i32, %c0_i32_0, %c0_i32_1 : i32, i32, i32
  }
}

</mosaic_0001>

<llo_original>
// kernel: _decoder_lstm_forward_impl.1
$region0: #{_decoder_lstm_forward_impl.1}
  #allocation0 [shape = 'u32[]', space=smem, size = 0x4, offset = 0x4, fixed_abs, tag = 'smem constant byte address 0x4 - core index']
  #allocation1 [shape = 'u32[144,128]{1,0:T(1,128)}', space=vmem, size = 0x12000, scoped, tag = 'internal scratch']
  #allocation2 [shape = 'f32[8,32]{1,0:T(8,128)}', space=vmem, size = 0x1000, scoped, tag = 'scratch operand']
  %s0 = inlined_call_operand.hbm [shape: f32[8,32], index: 0, kind: input, shape index: {}]
  %s1 = inlined_call_operand.hbm [shape: f32[2,8,32], index: 1, kind: input, shape index: {}, may-alias: {1,10}]
  %s2 = inlined_call_operand.hbm [shape: f32[2,8,32], index: 2, kind: input, shape index: {}, may-alias: {2,11}]
  %s3 = inlined_call_operand.hbm [shape: f32[32,128], index: 3, kind: input, shape index: {}]
  %s4 = inlined_call_operand.hbm [shape: f32[2,32,128], index: 4, kind: input, shape index: {}]
  %s5 = inlined_call_operand.hbm [shape: f32[1,32,128], index: 5, kind: input, shape index: {}]
  %s6 = inlined_call_operand.hbm [shape: f32[2,1,128], index: 6, kind: input, shape index: {}]
  %s7 = inlined_call_operand.hbm [shape: f32[32,128], index: 7, kind: input, shape index: {}]
  %s8 = inlined_call_operand.hbm [shape: f32[1,128], index: 8, kind: input, shape index: {}]
  %s9 = inlined_call_operand.hbm [shape: f32[8,128], index: 9, kind: output, shape index: {0}]
  %s10 = inlined_call_operand.hbm [shape: f32[2,8,32], index: 10, kind: output, shape index: {1}, may-alias: {1,10}]
  %s11 = inlined_call_operand.hbm [shape: f32[2,8,32], index: 11, kind: output, shape index: {2}, may-alias: {2,11}]
  %12 = xla_tuple %s9, %s10, %s11
  %s13 = sld [smem:[#allocation0]]
  $region102: #{_decoder_lstm_forward_impl.1} parent=0
    _
  %s15 = ssub.s32 1, %s13
  %s16 = scalar_select 0, %s15, %s13
  $region1: #{_decoder_lstm_forward_impl.1} parent=0
    #allocation3 [shape = 'u8[4096]{0}', space=vmem, size = 0x1000, scoped, tag = 'input window, operand 0, single buffered']
    #allocation4 [shape = 's32[1]{0}', space=sflag, size = 0x4, scoped, tag = 'scoped memory for _decoder_lstm_forward_impl.1']
    #allocation5 [shape = 's32[1]{0}', space=sflag, size = 0x4, scoped, tag = 'scoped memory for _decoder_lstm_forward_impl.1']
    #allocation6 [shape = 'u8[8192]{0}', space=vmem, size = 0x2000, scoped, tag = 'input window, operand 1, single buffered']
    #allocation7 [shape = 's32[1]{0}', space=sflag, size = 0x4, scoped, tag = 'scoped memory for _decoder_lstm_forward_impl.1']
    #allocation8 [shape = 'u8[8192]{0}', space=vmem, size = 0x2000, scoped, tag = 'input window, operand 2, single buffered']
    #allocation9 [shape = 'u8[16384]{0}', space=vmem, size = 0x4000, scoped, tag = 'input window, operand 3, single buffered']
    #allocation10 [shape = 's32[1]{0}', space=sflag, size = 0x4, scoped, tag = 'scoped memory for _decoder_lstm_forward_impl.1']
    #allocation11 [shape = 'u8[32768]{0}', space=vmem, size = 0x8000, scoped, tag = 'input window, operand 4, single buffered']
    #allocation12 [shape = 'u8[16384]{0}', space=vmem, size = 0x4000, scoped, tag = 'input window, operand 5, single buffered']
    #allocation13 [shape = 's32[1]{0}', space=sflag, size = 0x4, scoped, tag = 'scoped memory for _decoder_lstm_forward_impl.1']
    #allocation14 [shape = 'u8[1024]{0}', space=vmem, size = 0x400, scoped, tag = 'input window, operand 6, single buffered']
    #allocation15 [shape = 'u8[16384]{0}', space=vmem, size = 0x4000, scoped, tag = 'input window, operand 7, single buffered']
    #allocation16 [shape = 's32[1]{0}', space=sflag, size = 0x4, scoped, tag = 'scoped memory for _decoder_lstm_forward_impl.1']
    #allocation17 [shape = 'u8[512]{0}', space=vmem, size = 0x400, scoped, tag = 'input window, operand 8, single buffered']
    #allocation18 [shape = 'u8[4096]{0}', space=vmem, size = 0x1000, scoped, tag = 'output window, operand 0, single buffered']
    #allocation19 [shape = 'u8[8192]{0}', space=vmem, size = 0x2000, scoped, tag = 'output window, operand 1, single buffered']
    #allocation20 [shape = 's32[1]{0}', space=sflag, size = 0x4, scoped, tag = 'scoped memory for _decoder_lstm_forward_impl.1']
    #allocation21 [shape = 'u8[8192]{0}', space=vmem, size = 0x2000, scoped, tag = 'output window, operand 2, single buffered']
    %17 = vsyncpa [#allocation4], 0
    %18 = vsyncpa [#allocation7], 0
    %19 = vsyncpa [#allocation10], 0
    %20 = vsyncpa [#allocation13], 0
    %21 = vsyncpa [#allocation16], 0
    %22 = vsyncpa [#allocation5], 0
    %23 = vsyncpa [#allocation20], 0
    // Predicated region
    $region2: #{_decoder_lstm_forward_impl.1} parent=1 // pred_check
      _
    $region3: #{_decoder_lstm_forward_impl.1} parent=1 // pred_check_branch
      %25 = sbr.rel (0) target = $region5
    $region4: #{_decoder_lstm_forward_impl.1} parent=1 // pred_region
      %s27 = ssub.s32 128, 128
      %28 = vsyncadd [#allocation4], %s27
      %s30 = sshll.u32 [#allocation3], 4
      %s31 = int_to_ptr.vmem [resolvable:$true] %s30
      %33 = dma.hbm_to_vmem [thread:$0]  %s0, 128, %s31, [#allocation4]
    $region5: #{_decoder_lstm_forward_impl.1} parent=1 // pred_fallthru
      _
    // Predicated region
    $region6: #{_decoder_lstm_forward_impl.1} parent=1 // pred_check
      _
    $region7: #{_decoder_lstm_forward_impl.1} parent=1 // pred_check_branch
      %35 = sbr.rel (0) target = $region9
    $region8: #{_decoder_lstm_forward_impl.1} parent=1 // pred_region
      %s37 = ssub.s32 256, 256
      %38 = vsyncadd [#allocation7], %s37
      %s39 = sshll.u32 [#allocation6], 4
      %s40 = int_to_ptr.vmem [resolvable:$true] %s39
      %45 = dma.hbm_to_vmem [thread:$0]  %s1, 256, %s40, [#allocation7], 128, 128, 8
    $region9: #{_decoder_lstm_forward_impl.1} parent=1 // pred_fallthru
      _
    // Predicated region
    $region10: #{_decoder_lstm_forward_impl.1} parent=1 // pred_check
      _
    $region11: #{_decoder_lstm_forward_impl.1} parent=1 // pred_check_branch
      %47 = sbr.rel (0) target = $region13
    $region12: #{_decoder_lstm_forward_impl.1} parent=1 // pred_region
      %s49 = ssub.s32 256, 256
      %50 = vsyncadd [#allocation7], %s49
      %s51 = sshll.u32 [#allocation8], 4
      %s52 = int_to_ptr.vmem [resolvable:$true] %s51
      %57 = dma.hbm_to_vmem [thread:$0]  %s2, 256, %s52, [#allocation7], 128, 128, 8
    $region13: #{_decoder_lstm_forward_impl.1} parent=1 // pred_fallthru
      _
    // Predicated region
    $region14: #{_decoder_lstm_forward_impl.1} parent=1 // pred_check
      _
    $region15: #{_decoder_lstm_forward_impl.1} parent=1 // pred_check_branch
      %59 = sbr.rel (0) target = $region17
    $region16: #{_decoder_lstm_forward_impl.1} parent=1 // pred_region
      %s61 = ssub.s32 512, 512
      %62 = vsyncadd [#allocation10], %s61
      %s63 = sshll.u32 [#allocation9], 4
      %s64 = int_to_ptr.vmem [resolvable:$true] %s63
      %69 = dma.hbm_to_vmem [thread:$0]  %s3, 512, %s64, [#allocation10], 128, 128, 8
    $region17: #{_decoder_lstm_forward_impl.1} parent=1 // pred_fallthru
      _
    // Predicated region
    $region18: #{_decoder_lstm_forward_impl.1} parent=1 // pred_check
      _
    $region19: #{_decoder_lstm_forward_impl.1} parent=1 // pred_check_branch
      %71 = sbr.rel (0) target = $region21
    $region20: #{_decoder_lstm_forward_impl.1} parent=1 // pred_region
      %s73 = ssub.s32 1024, 1024
      %74 = vsyncadd [#allocation10], %s73
      %s75 = sshll.u32 [#allocation11], 4
      %s76 = int_to_ptr.vmem [resolvable:$true] %s75
      %81 = dma.hbm_to_vmem [thread:$0]  %s4, 1024, %s76, [#allocation10], 128, 128, 8
    $region21: #{_decoder_lstm_forward_impl.1} parent=1 // pred_fallthru
      _
    // Predicated region
    $region22: #{_decoder_lstm_forward_impl.1} parent=1 // pred_check
      _
    $region23: #{_decoder_lstm_forward_impl.1} parent=1 // pred_check_branch
      %83 = sbr.rel (0) target = $region25
    $region24: #{_decoder_lstm_forward_impl.1} parent=1 // pred_region
      %s85 = ssub.s32 512, 512
      %86 = vsyncadd [#allocation13], %s85
      %s87 = sshll.u32 [#allocation12], 4
      %s88 = int_to_ptr.vmem [resolvable:$true] %s87
      %93 = dma.hbm_to_vmem [thread:$0]  %s5, 512, %s88, [#allocation13], 128, 128, 8
    $region25: #{_decoder_lstm_forward_impl.1} parent=1 // pred_fallthru
      _
    // Predicated region
    $region26: #{_decoder_lstm_forward_impl.1} parent=1 // pred_check
      _
    $region27: #{_decoder_lstm_forward_impl.1} parent=1 // pred_check_branch
      %95 = sbr.rel (0) target = $region29
    $region28: #{_decoder_lstm_forward_impl.1} parent=1 // pred_region
      %s97 = ssub.s32 32, 32
      %98 = vsyncadd [#allocation13], %s97
      %s99 = sshll.u32 [#allocation14], 4
      %s100 = int_to_ptr.vmem [resolvable:$true] %s99
      %105 = dma.hbm_to_vmem [thread:$0]  %s6, 32, %s100, [#allocation13], 16, 16, 1
    $region29: #{_decoder_lstm_forward_impl.1} parent=1 // pred_fallthru
      _
    // Predicated region
    $region30: #{_decoder_lstm_forward_impl.1} parent=1 // pred_check
      _
    $region31: #{_decoder_lstm_forward_impl.1} parent=1 // pred_check_branch
      %107 = sbr.rel (0) target = $region33
    $region32: #{_decoder_lstm_forward_impl.1} parent=1 // pred_region
      %s109 = ssub.s32 512, 512
      %110 = vsyncadd [#allocation16], %s109
      %s111 = sshll.u32 [#allocation15], 4
      %s112 = int_to_ptr.vmem [resolvable:$true] %s111
      %117 = dma.hbm_to_vmem [thread:$0]  %s7, 512, %s112, [#allocation16], 128, 128, 8
    $region33: #{_decoder_lstm_forward_impl.1} parent=1 // pred_fallthru
      _
    // Predicated region
    $region34: #{_decoder_lstm_forward_impl.1} parent=1 // pred_check
      _
    $region35: #{_decoder_lstm_forward_impl.1} parent=1 // pred_check_branch
      %119 = sbr.rel (0) target = $region37
    $region36: #{_decoder_lstm_forward_impl.1} parent=1 // pred_region
      %s121 = ssub.s32 16, 16
      %122 = vsyncadd [#allocation16], %s121
      %s124 = sshll.u32 [#allocation17], 4
      %s125 = int_to_ptr.vmem [resolvable:$true] %s124
      %127 = dma.hbm_to_vmem [thread:$0]  %s8, 16, %s125, [#allocation16]
    $region37: #{_decoder_lstm_forward_impl.1} parent=1 // pred_fallthru
      _
    // Predicated region
    $region38: #{_decoder_lstm_forward_impl.1} parent=1 // pred_check
      _
    $region39: #{_decoder_lstm_forward_impl.1} parent=1 // pred_check_branch
      %129 = sbr.rel (0) target = $region41
    $region40: #{_decoder_lstm_forward_impl.1} parent=1 // pred_region
      %130 = dma.done [#allocation4], 128
    $region41: #{_decoder_lstm_forward_impl.1} parent=1 // pred_fallthru
      _
    // Predicated region
    $region42: #{_decoder_lstm_forward_impl.1} parent=1 // pred_check
      _
    $region43: #{_decoder_lstm_forward_impl.1} parent=1 // pred_check_branch
      %132 = sbr.rel (0) target = $region45
    $region44: #{_decoder_lstm_forward_impl.1} parent=1 // pred_region
      %133 = dma.done [#allocation7], 256
    $region45: #{_decoder_lstm_forward_impl.1} parent=1 // pred_fallthru
      _
    // Predicated region
    $region46: #{_decoder_lstm_forward_impl.1} parent=1 // pred_check
      _
    $region47: #{_decoder_lstm_forward_impl.1} parent=1 // pred_check_branch
      %135 = sbr.rel (0) target = $region49
    $region48: #{_decoder_lstm_forward_impl.1} parent=1 // pred_region
      %136 = dma.done [#allocation7], 256
    $region49: #{_decoder_lstm_forward_impl.1} parent=1 // pred_fallthru
      _
    // Predicated region
    $region50: #{_decoder_lstm_forward_impl.1} parent=1 // pred_check
      _
    $region51: #{_decoder_lstm_forward_impl.1} parent=1 // pred_check_branch
      %138 = sbr.rel (0) target = $region53
    $region52: #{_decoder_lstm_forward_impl.1} parent=1 // pred_region
      %139 = dma.done [#allocation10], 512
    $region53: #{_decoder_lstm_forward_impl.1} parent=1 // pred_fallthru
      _
    // Predicated region
    $region54: #{_decoder_lstm_forward_impl.1} parent=1 // pred_check
      _
    $region55: #{_decoder_lstm_forward_impl.1} parent=1 // pred_check_branch
      %141 = sbr.rel (0) target = $region57
    $region56: #{_decoder_lstm_forward_impl.1} parent=1 // pred_region
      %142 = dma.done [#allocation10], 1024
    $region57: #{_decoder_lstm_forward_impl.1} parent=1 // pred_fallthru
      _
    // Predicated region
    $region58: #{_decoder_lstm_forward_impl.1} parent=1 // pred_check
      _
    $region59: #{_decoder_lstm_forward_impl.1} parent=1 // pred_check_branch
      %144 = sbr.rel (0) target = $region61
    $region60: #{_decoder_lstm_forward_impl.1} parent=1 // pred_region
      %145 = dma.done [#allocation13], 512
    $region61: #{_decoder_lstm_forward_impl.1} parent=1 // pred_fallthru
      _
    // Predicated region
    $region62: #{_decoder_lstm_forward_impl.1} parent=1 // pred_check
      _
    $region63: #{_decoder_lstm_forward_impl.1} parent=1 // pred_check_branch
      %147 = sbr.rel (0) target = $region65
    $region64: #{_decoder_lstm_forward_impl.1} parent=1 // pred_region
      %148 = dma.done [#allocation13], 32
    $region65: #{_decoder_lstm_forward_impl.1} parent=1 // pred_fallthru
      _
    // Predicated region
    $region66: #{_decoder_lstm_forward_impl.1} parent=1 // pred_check
      _
    $region67: #{_decoder_lstm_forward_impl.1} parent=1 // pred_check_branch
      %150 = sbr.rel (0) target = $region69
    $region68: #{_decoder_lstm_forward_impl.1} parent=1 // pred_region
      %151 = dma.done [#allocation16], 512
    $region69: #{_decoder_lstm_forward_impl.1} parent=1 // pred_fallthru
      _
    // Predicated region
    $region70: #{_decoder_lstm_forward_impl.1} parent=1 // pred_check
      _
    $region71: #{_decoder_lstm_forward_impl.1} parent=1 // pred_check_branch
      %153 = sbr.rel (0) target = $region73
    $region72: #{_decoder_lstm_forward_impl.1} parent=1 // pred_region
      %154 = dma.done [#allocation16], 16
    $region73: #{_decoder_lstm_forward_impl.1} parent=1 // pred_fallthru
      _
    %p155 = scmp.eq.s32.totalorder 0, 0
    // Predicated region
    $region74: #{_decoder_lstm_forward_impl.1} parent=1 // pred_check
      %p156 = pneg %p155
    $region75: #{_decoder_lstm_forward_impl.1} parent=1 // pred_check_branch
      %158 = sbr.rel (%p156) target = $region77
    $region76: #{_decoder_lstm_forward_impl.1} parent=1 // pred_region
      %v159 = vld [vmem:[#allocation3] sm:$0xff]
      %v160 = vld [vmem:[#allocation9] sm:$0xff]
      %v161 = vld [vmem:[#allocation9 + $0x8] sm:$0xff]
      %v162 = vld [vmem:[#allocation9 + $0x10] sm:$0xff]
      %v163 = vld [vmem:[#allocation9 + $0x18] sm:$0xff]
      %v164 = vld [vmem:[#allocation6] sm:$0xff]
      %v165 = vld [vmem:[#allocation11] sm:$0xff]
      %v166 = vld [vmem:[#allocation11 + $0x8] sm:$0xff]
      %v167 = vld [vmem:[#allocation11 + $0x10] sm:$0xff]
      %v168 = vld [vmem:[#allocation11 + $0x18] sm:$0xff]
      %v169 = vld [vmem:[#allocation14] sm:$0x1]
      %v170 = vld [vmem:[#allocation8] sm:$0xff]
      %vm171 = vcmask 261120
      %v173 = vsel %vm171, %v164, 0
      %175 = vmatprep.subr.mxu0 0.0
      %176 = vmatpush1.msra.mxu0 %v165
      %177 = vmatprep.subr.mxu0 0.0
      %178 = vmatpush1.msra.mxu0 %v166
      %179 = vmatprep.subr.mxu0 0.0
      %180 = vmatpush1.msra.mxu0 %v167
      %181 = vmatprep.subr.mxu0 0.0
      %182 = vmatpush1.msra.mxu0 %v168
      %183 = vmatprep.subr.mxu0 0.0
      %184 = vmatpush1.msra.mxu0 0.0
      %185 = vmatprep.subr.mxu0 0.0
      %186 = vmatpush1.msra.mxu0 0.0
      %187 = vmatprep.subr.mxu0 0.0
      %188 = vmatpush1.msra.mxu0 0.0
      %189 = vmatprep.subr.mxu0 0.0
      %190 = vmatpush1.msra.mxu0 0.0
      %191 = vmatprep.subr.mxu0 0.0
      %192 = vmatpush1.msra.mxu0 0.0
      %193 = vmatprep.subr.mxu0 0.0
      %194 = vmatpush1.msra.mxu0 0.0
      %195 = vmatprep.subr.mxu0 0.0
      %196 = vmatpush1.msra.mxu0 0.0
      %197 = vmatprep.subr.mxu0 0.0
      %198 = vmatpush1.msra.mxu0 0.0
      %199 = vmatprep.subr.mxu0 0.0
      %200 = vmatpush1.msra.mxu0 0.0
      %201 = vmatprep.subr.mxu0 0.0
      %202 = vmatpush1.msra.mxu0 0.0
      %203 = vmatprep.subr.mxu0 0.0
      %204 = vmatpush1.msra.mxu0 0.0
      %205 = vmatprep.subr.mxu0 0.0
      %206 = vmatpush1.msra.mxu0 0.0
      %207 = vmatprep.subr.mxu0 0.0
      %208 = vmatpush1.msra.mxu0 0.0
      %209 = vmatprep.subr.mxu0 0.0
      %210 = vmatpush1.msra.mxu0 0.0
      %211 = vmatprep.subr.mxu0 0.0
      %212 = vmatpush1.msra.mxu0 0.0
      %213 = vmatprep.subr.mxu0 0.0
      %214 = vmatpush1.msra.mxu0 0.0
      %215 = vmatprep.subr.mxu0 0.0
      %216 = vmatpush1.msra.mxu0 0.0
      %217 = vmatprep.subr.mxu0 0.0
      %218 = vmatpush1.msra.mxu0 0.0
      %219 = vmatprep.subr.mxu0 0.0
      %220 = vmatpush1.msra.mxu0 0.0
      %221 = vmatprep.subr.mxu0 0.0
      %222 = vmatpush1.msra.mxu0 0.0
      %223 = vmatprep.subr.mxu0 0.0
      %224 = vmatpush1.msra.mxu0 0.0
      %225 = vmatprep.subr.mxu0 0.0
      %226 = vmatpush1.msra.mxu0 0.0
      %227 = vmatprep.subr.mxu0 0.0
      %228 = vmatpush1.msra.mxu0 0.0
      %229 = vmatprep.subr.mxu0 0.0
      %230 = vmatpush1.msra.mxu0 0.0
      %231 = vmatprep.subr.mxu0 0.0
      %232 = vmatpush1.msra.mxu0 0.0
      %233 = vmatprep.subr.mxu0 0.0
      %234 = vmatpush1.msra.mxu0 0.0
      %235 = vmatprep.subr.mxu0 0.0
      %236 = vmatpush1.msra.mxu0 0.0
      %237 = vmatprep.subr.mxu0 0.0
      %238 = vmatpush1.msra.mxu0 0.0
      %239 = vmatprep.mubr.f32.mxu0 0.0
      %240 = vmatmul.mubr.f32.gmra.mrb[0].mxu0 %v173
      %v241 = vpop.f32.mrb[0].mxu0
      %v242 = vadd.f32 0.0, %v241
      %v243 = vpop.f32.mrb[0].mxu0
      %244 = vdwg.mxu0
      %v246 = vsel %vm171, %v159, 0
      %248 = vmatprep.subr.mxu0 0.0
      %249 = vmatpush1.msra.mxu0 %v160
      %250 = vmatprep.subr.mxu0 0.0
      %251 = vmatpush1.msra.mxu0 %v161
      %252 = vmatprep.subr.mxu0 0.0
      %253 = vmatpush1.msra.mxu0 %v162
      %254 = vmatprep.subr.mxu0 0.0
      %255 = vmatpush1.msra.mxu0 %v163
      %256 = vmatprep.subr.mxu0 0.0
      %257 = vmatpush1.msra.mxu0 0.0
      %258 = vmatprep.subr.mxu0 0.0
      %259 = vmatpush1.msra.mxu0 0.0
      %260 = vmatprep.subr.mxu0 0.0
      %261 = vmatpush1.msra.mxu0 0.0
      %262 = vmatprep.subr.mxu0 0.0
      %263 = vmatpush1.msra.mxu0 0.0
      %264 = vmatprep.subr.mxu0 0.0
      %265 = vmatpush1.msra.mxu0 0.0
      %266 = vmatprep.subr.mxu0 0.0
      %267 = vmatpush1.msra.mxu0 0.0
      %268 = vmatprep.subr.mxu0 0.0
      %269 = vmatpush1.msra.mxu0 0.0
      %270 = vmatprep.subr.mxu0 0.0
      %271 = vmatpush1.msra.mxu0 0.0
      %272 = vmatprep.subr.mxu0 0.0
      %273 = vmatpush1.msra.mxu0 0.0
      %274 = vmatprep.subr.mxu0 0.0
      %275 = vmatpush1.msra.mxu0 0.0
      %276 = vmatprep.subr.mxu0 0.0
      %277 = vmatpush1.msra.mxu0 0.0
      %278 = vmatprep.subr.mxu0 0.0
      %279 = vmatpush1.msra.mxu0 0.0
      %280 = vmatprep.subr.mxu0 0.0
      %281 = vmatpush1.msra.mxu0 0.0
      %282 = vmatprep.subr.mxu0 0.0
      %283 = vmatpush1.msra.mxu0 0.0
      %284 = vmatprep.subr.mxu0 0.0
      %285 = vmatpush1.msra.mxu0 0.0
      %286 = vmatprep.subr.mxu0 0.0
      %287 = vmatpush1.msra.mxu0 0.0
      %288 = vmatprep.subr.mxu0 0.0
      %289 = vmatpush1.msra.mxu0 0.0
      %290 = vmatprep.subr.mxu0 0.0
      %291 = vmatpush1.msra.mxu0 0.0
      %292 = vmatprep.subr.mxu0 0.0
      %293 = vmatpush1.msra.mxu0 0.0
      %294 = vmatprep.subr.mxu0 0.0
      %295 = vmatpush1.msra.mxu0 0.0
      %296 = vmatprep.subr.mxu0 0.0
      %297 = vmatpush1.msra.mxu0 0.0
      %298 = vmatprep.subr.mxu0 0.0
      %299 = vmatpush1.msra.mxu0 0.0
      %300 = vmatprep.subr.mxu0 0.0
      %301 = vmatpush1.msra.mxu0 0.0
      %302 = vmatprep.subr.mxu0 0.0
      %303 = vmatpush1.msra.mxu0 0.0
      %304 = vmatprep.subr.mxu0 0.0
      %305 = vmatpush1.msra.mxu0 0.0
      %306 = vmatprep.subr.mxu0 0.0
      %307 = vmatpush1.msra.mxu0 0.0
      %308 = vmatprep.subr.mxu0 0.0
      %309 = vmatpush1.msra.mxu0 0.0
      %310 = vmatprep.subr.mxu0 0.0
      %311 = vmatpush1.msra.mxu0 0.0
      %312 = vmatprep.mubr.f32.mxu0 0.0
      %313 = vmatmul.mubr.f32.gmra.mrb[0].mxu0 %v246
      %v314 = vpop.f32.mrb[0].mxu0
      %v315 = vadd.f32 %v242, %v314
      %v316 = vpop.f32.mrb[0].mxu0
      %317 = vdwg.mxu0
      %v319 = vlaneseq
      %v320 = vshrl.u32 %v319, 7
      %v321 = vsub.s32 0, %v320
      %v322 = vrot.slane %v169, %v321
      %v324 = vadd.f32 %v315, %v322
      %v325 = vlaneseq
      %v326 = vand.u32 %v325, 127
      %vm327 = vcmp.ge.s32.totalorder %v326, 64
      %vm328 = vcmp.lt.s32.totalorder %v326, 96
      %vm329 = vmand %vm327, %vm328
      %v330 = vtanh.pop %v324
      %v331 = vxor.u32 %v324, 2147483648
      %v332 = vmul.f32 %v331, 1.442695
      %v333 = vpow.pop %v332
      %v334 = vadd.f32 %v333, 1.0
      %v335 = vrcp.pop %v334
      %v336 = vmul.f32 1.0, %v335
      %v337 = vsel %vm329, %v330, %v336
      %339 = vrot.lane.b32.xlu0 %v170, 32
      %v340 = vpop.permute.xlu0 %339
      %v342 = vmul.f32 %v337, %v340
      %344 = vrot.lane.b32.xlu0 %v337, 64
      %v345 = vpop.permute.xlu0 %344
      %v347 = vmul.f32 %v337, %v345
      %349 = vrot.lane.b32.xlu0 %v347, 32
      %v350 = vpop.permute.xlu0 %349
      %v352 = vadd.f32 %v342, %v350
      %v353 = vtanh.pop %v352
      %355 = vrot.lane.b32.xlu0 %v353, 64
      %v356 = vpop.permute.xlu0 %355
      %v358 = vmul.f32 %v337, %v356
      %360 = vrot.lane.b32.xlu0 %v358, 32
      %v361 = vpop.permute.xlu0 %360
      %363 = vst.msk [vmem:[#allocation19] sm:$0xff] %vm171, %v361
      %365 = vrot.lane.b32.xlu0 %v352, 96
      %v366 = vpop.permute.xlu0 %365
      %368 = vst.msk [vmem:[#allocation21] sm:$0xff] %vm171, %v366
      %v369 = vld [vmem:[#allocation12] sm:$0xff]
      %v370 = vld [vmem:[#allocation12 + $0x8] sm:$0xff]
      %v371 = vld [vmem:[#allocation12 + $0x10] sm:$0xff]
      %v372 = vld [vmem:[#allocation12 + $0x18] sm:$0xff]
      %s373 = scalar_lea.vmem [#allocation6], 8
      %v374 = vld [vmem:[%s373] sm:$0xff]
      %s375 = scalar_lea.vmem [#allocation11], 32
      %v376 = vld [vmem:[%s375] sm:$0xff]
      %v377 = vld [vmem:[%s375 + $0x8] sm:$0xff]
      %v378 = vld [vmem:[%s375 + $0x10] sm:$0xff]
      %v379 = vld [vmem:[%s375 + $0x18] sm:$0xff]
      %s380 = scalar_lea.vmem [#allocation14], 1
      %v381 = vld [vmem:[%s380] sm:$0x1]
      %s382 = scalar_lea.vmem [#allocation8], 8
      %v383 = vld [vmem:[%s382] sm:$0xff]
      %v385 = vsel %vm171, %v374, 0
      %387 = vmatprep.subr.mxu0 0.0
      %388 = vmatpush1.msra.mxu0 %v376
      %389 = vmatprep.subr.mxu0 0.0
      %390 = vmatpush1.msra.mxu0 %v377
      %391 = vmatprep.subr.mxu0 0.0
      %392 = vmatpush1.msra.mxu0 %v378
      %393 = vmatprep.subr.mxu0 0.0
      %394 = vmatpush1.msra.mxu0 %v379
      %395 = vmatprep.subr.mxu0 0.0
      %396 = vmatpush1.msra.mxu0 0.0
      %397 = vmatprep.subr.mxu0 0.0
      %398 = vmatpush1.msra.mxu0 0.0
      %399 = vmatprep.subr.mxu0 0.0
      %400 = vmatpush1.msra.mxu0 0.0
      %401 = vmatprep.subr.mxu0 0.0
      %402 = vmatpush1.msra.mxu0 0.0
      %403 = vmatprep.subr.mxu0 0.0
      %404 = vmatpush1.msra.mxu0 0.0
      %405 = vmatprep.subr.mxu0 0.0
      %406 = vmatpush1.msra.mxu0 0.0
      %407 = vmatprep.subr.mxu0 0.0
      %408 = vmatpush1.msra.mxu0 0.0
      %409 = vmatprep.subr.mxu0 0.0
      %410 = vmatpush1.msra.mxu0 0.0
      %411 = vmatprep.subr.mxu0 0.0
      %412 = vmatpush1.msra.mxu0 0.0
      %413 = vmatprep.subr.mxu0 0.0
      %414 = vmatpush1.msra.mxu0 0.0
      %415 = vmatprep.subr.mxu0 0.0
      %416 = vmatpush1.msra.mxu0 0.0
      %417 = vmatprep.subr.mxu0 0.0
      %418 = vmatpush1.msra.mxu0 0.0
      %419 = vmatprep.subr.mxu0 0.0
      %420 = vmatpush1.msra.mxu0 0.0
      %421 = vmatprep.subr.mxu0 0.0
      %422 = vmatpush1.msra.mxu0 0.0
      %423 = vmatprep.subr.mxu0 0.0
      %424 = vmatpush1.msra.mxu0 0.0
      %425 = vmatprep.subr.mxu0 0.0
      %426 = vmatpush1.msra.mxu0 0.0
      %427 = vmatprep.subr.mxu0 0.0
      %428 = vmatpush1.msra.mxu0 0.0
      %429 = vmatprep.subr.mxu0 0.0
      %430 = vmatpush1.msra.mxu0 0.0
      %431 = vmatprep.subr.mxu0 0.0
      %432 = vmatpush1.msra.mxu0 0.0
      %433 = vmatprep.subr.mxu0 0.0
      %434 = vmatpush1.msra.mxu0 0.0
      %435 = vmatprep.subr.mxu0 0.0
      %436 = vmatpush1.msra.mxu0 0.0
      %437 = vmatprep.subr.mxu0 0.0
      %438 = vmatpush1.msra.mxu0 0.0
      %439 = vmatprep.subr.mxu0 0.0
      %440 = vmatpush1.msra.mxu0 0.0
      %441 = vmatprep.subr.mxu0 0.0
      %442 = vmatpush1.msra.mxu0 0.0
      %443 = vmatprep.subr.mxu0 0.0
      %444 = vmatpush1.msra.mxu0 0.0
      %445 = vmatprep.subr.mxu0 0.0
      %446 = vmatpush1.msra.mxu0 0.0
      %447 = vmatprep.subr.mxu0 0.0
      %448 = vmatpush1.msra.mxu0 0.0
      %449 = vmatprep.subr.mxu0 0.0
      %450 = vmatpush1.msra.mxu0 0.0
      %451 = vmatprep.mubr.f32.mxu0 0.0
      %452 = vmatmul.mubr.f32.gmra.mrb[0].mxu0 %v385
      %v453 = vpop.f32.mrb[0].mxu0
      %v454 = vadd.f32 0.0, %v453
      %v455 = vpop.f32.mrb[0].mxu0
      %456 = vdwg.mxu0
      %v457 = vsel %vm171, %v361, 0
      %459 = vmatprep.subr.mxu0 0.0
      %460 = vmatpush1.msra.mxu0 %v369
      %461 = vmatprep.subr.mxu0 0.0
      %462 = vmatpush1.msra.mxu0 %v370
      %463 = vmatprep.subr.mxu0 0.0
      %464 = vmatpush1.msra.mxu0 %v371
      %465 = vmatprep.subr.mxu0 0.0
      %466 = vmatpush1.msra.mxu0 %v372
      %467 = vmatprep.subr.mxu0 0.0
      %468 = vmatpush1.msra.mxu0 0.0
      %469 = vmatprep.subr.mxu0 0.0
      %470 = vmatpush1.msra.mxu0 0.0
      %471 = vmatprep.subr.mxu0 0.0
      %472 = vmatpush1.msra.mxu0 0.0
      %473 = vmatprep.subr.mxu0 0.0
      %474 = vmatpush1.msra.mxu0 0.0
      %475 = vmatprep.subr.mxu0 0.0
      %476 = vmatpush1.msra.mxu0 0.0
      %477 = vmatprep.subr.mxu0 0.0
      %478 = vmatpush1.msra.mxu0 0.0
      %479 = vmatprep.subr.mxu0 0.0
      %480 = vmatpush1.msra.mxu0 0.0
      %481 = vmatprep.subr.mxu0 0.0
      %482 = vmatpush1.msra.mxu0 0.0
      %483 = vmatprep.subr.mxu0 0.0
      %484 = vmatpush1.msra.mxu0 0.0
      %485 = vmatprep.subr.mxu0 0.0
      %486 = vmatpush1.msra.mxu0 0.0
      %487 = vmatprep.subr.mxu0 0.0
      %488 = vmatpush1.msra.mxu0 0.0
      %489 = vmatprep.subr.mxu0 0.0
      %490 = vmatpush1.msra.mxu0 0.0
      %491 = vmatprep.subr.mxu0 0.0
      %492 = vmatpush1.msra.mxu0 0.0
      %493 = vmatprep.subr.mxu0 0.0
      %494 = vmatpush1.msra.mxu0 0.0
      %495 = vmatprep.subr.mxu0 0.0
      %496 = vmatpush1.msra.mxu0 0.0
      %497 = vmatprep.subr.mxu0 0.0
      %498 = vmatpush1.msra.mxu0 0.0
      %499 = vmatprep.subr.mxu0 0.0
      %500 = vmatpush1.msra.mxu0 0.0
      %501 = vmatprep.subr.mxu0 0.0
      %502 = vmatpush1.msra.mxu0 0.0
      %503 = vmatprep.subr.mxu0 0.0
      %504 = vmatpush1.msra.mxu0 0.0
      %505 = vmatprep.subr.mxu0 0.0
      %506 = vmatpush1.msra.mxu0 0.0
      %507 = vmatprep.subr.mxu0 0.0
      %508 = vmatpush1.msra.mxu0 0.0
      %509 = vmatprep.subr.mxu0 0.0
      %510 = vmatpush1.msra.mxu0 0.0
      %511 = vmatprep.subr.mxu0 0.0
      %512 = vmatpush1.msra.mxu0 0.0
      %513 = vmatprep.subr.mxu0 0.0
      %514 = vmatpush1.msra.mxu0 0.0
      %515 = vmatprep.subr.mxu0 0.0
      %516 = vmatpush1.msra.mxu0 0.0
      %517 = vmatprep.subr.mxu0 0.0
      %518 = vmatpush1.msra.mxu0 0.0
      %519 = vmatprep.subr.mxu0 0.0
      %520 = vmatpush1.msra.mxu0 0.0
      %521 = vmatprep.subr.mxu0 0.0
      %522 = vmatpush1.msra.mxu0 0.0
      %523 = vmatprep.mubr.f32.mxu0 0.0
      %524 = vmatmul.mubr.f32.gmra.mrb[0].mxu0 %v457
      %v525 = vpop.f32.mrb[0].mxu0
      %v526 = vadd.f32 %v454, %v525
      %v527 = vpop.f32.mrb[0].mxu0
      %528 = vdwg.mxu0
      %v530 = vlaneseq
      %v531 = vshrl.u32 %v530, 7
      %v532 = vsub.s32 0, %v531
      %v533 = vrot.slane %v381, %v532
      %v535 = vadd.f32 %v526, %v533
      %v536 = vtanh.pop %v535
      %v537 = vxor.u32 %v535, 2147483648
      %v538 = vmul.f32 %v537, 1.442695
      %v539 = vpow.pop %v538
      %v540 = vadd.f32 %v539, 1.0
      %v541 = vrcp.pop %v540
      %v542 = vmul.f32 1.0, %v541
      %v543 = vsel %vm329, %v536, %v542
      %545 = vrot.lane.b32.xlu0 %v383, 32
      %v546 = vpop.permute.xlu0 %545
      %v548 = vmul.f32 %v543, %v546
      %550 = vrot.lane.b32.xlu0 %v543, 64
      %v551 = vpop.permute.xlu0 %550
      %v553 = vmul.f32 %v543, %v551
      %555 = vrot.lane.b32.xlu0 %v553, 32
      %v556 = vpop.permute.xlu0 %555
      %v558 = vadd.f32 %v548, %v556
      %v559 = vtanh.pop %v558
      %561 = vrot.lane.b32.xlu0 %v559, 64
      %v562 = vpop.permute.xlu0 %561
      %v564 = vmul.f32 %v543, %v562
      %566 = vrot.lane.b32.xlu0 %v564, 32
      %v567 = vpop.permute.xlu0 %566
      %s569 = scalar_lea.vmem [#allocation19], 8
      %570 = vst.msk [vmem:[%s569] sm:$0xff] %vm171, %v567
      %572 = vrot.lane.b32.xlu0 %v558, 96
      %v573 = vpop.permute.xlu0 %572
      %s575 = scalar_lea.vmem [#allocation21], 8
      %576 = vst.msk [vmem:[%s575] sm:$0xff] %vm171, %v573
      %577 = vst.msk [vmem:[#allocation2] sm:$0xff] %vm171, %v567
    $region77: #{_decoder_lstm_forward_impl.1} parent=1 // pred_fallthru
      _
    %v578 = vld [vmem:[#allocation2] sm:$0xff]
    %v579 = vld [vmem:[#allocation15] sm:$0xff]
    %v580 = vld [vmem:[#allocation15 + $0x8] sm:$0xff]
    %v581 = vld [vmem:[#allocation15 + $0x10] sm:$0xff]
    %v582 = vld [vmem:[#allocation15 + $0x18] sm:$0xff]
    %v583 = vld [vmem:[#allocation17] sm:$0x1]
    %v585 = vlaneseq
    %v586 = vshrl.u32 %v585, 7
    %v587 = vsub.s32 0, %v586
    %v588 = vrot.slane %v583, %v587
    %vm590 = vcmask 261120
    %v592 = vsel %vm590, %v578, 0
    %594 = vmatprep.subr.mxu0 0.0
    %595 = vmatpush1.msra.mxu0 %v579
    %596 = vmatprep.subr.mxu0 0.0
    %597 = vmatpush1.msra.mxu0 %v580
    %598 = vmatprep.subr.mxu0 0.0
    %599 = vmatpush1.msra.mxu0 %v581
    %600 = vmatprep.subr.mxu0 0.0
    %601 = vmatpush1.msra.mxu0 %v582
    %602 = vmatprep.subr.mxu0 0.0
    %603 = vmatpush1.msra.mxu0 0.0
    %604 = vmatprep.subr.mxu0 0.0
    %605 = vmatpush1.msra.mxu0 0.0
    %606 = vmatprep.subr.mxu0 0.0
    %607 = vmatpush1.msra.mxu0 0.0
    %608 = vmatprep.subr.mxu0 0.0
    %609 = vmatpush1.msra.mxu0 0.0
    %610 = vmatprep.subr.mxu0 0.0
    %611 = vmatpush1.msra.mxu0 0.0
    %612 = vmatprep.subr.mxu0 0.0
    %613 = vmatpush1.msra.mxu0 0.0
    %614 = vmatprep.subr.mxu0 0.0
    %615 = vmatpush1.msra.mxu0 0.0
    %616 = vmatprep.subr.mxu0 0.0
    %617 = vmatpush1.msra.mxu0 0.0
    %618 = vmatprep.subr.mxu0 0.0
    %619 = vmatpush1.msra.mxu0 0.0
    %620 = vmatprep.subr.mxu0 0.0
    %621 = vmatpush1.msra.mxu0 0.0
    %622 = vmatprep.subr.mxu0 0.0
    %623 = vmatpush1.msra.mxu0 0.0
    %624 = vmatprep.subr.mxu0 0.0
    %625 = vmatpush1.msra.mxu0 0.0
    %626 = vmatprep.subr.mxu0 0.0
    %627 = vmatpush1.msra.mxu0 0.0
    %628 = vmatprep.subr.mxu0 0.0
    %629 = vmatpush1.msra.mxu0 0.0
    %630 = vmatprep.subr.mxu0 0.0
    %631 = vmatpush1.msra.mxu0 0.0
    %632 = vmatprep.subr.mxu0 0.0
    %633 = vmatpush1.msra.mxu0 0.0
    %634 = vmatprep.subr.mxu0 0.0
    %635 = vmatpush1.msra.mxu0 0.0
    %636 = vmatprep.subr.mxu0 0.0
    %637 = vmatpush1.msra.mxu0 0.0
    %638 = vmatprep.subr.mxu0 0.0
    %639 = vmatpush1.msra.mxu0 0.0
    %640 = vmatprep.subr.mxu0 0.0
    %641 = vmatpush1.msra.mxu0 0.0
    %642 = vmatprep.subr.mxu0 0.0
    %643 = vmatpush1.msra.mxu0 0.0
    %644 = vmatprep.subr.mxu0 0.0
    %645 = vmatpush1.msra.mxu0 0.0
    %646 = vmatprep.subr.mxu0 0.0
    %647 = vmatpush1.msra.mxu0 0.0
    %648 = vmatprep.subr.mxu0 0.0
    %649 = vmatpush1.msra.mxu0 0.0
    %650 = vmatprep.subr.mxu0 0.0
    %651 = vmatpush1.msra.mxu0 0.0
    %652 = vmatprep.subr.mxu0 0.0
    %653 = vmatpush1.msra.mxu0 0.0
    %654 = vmatprep.subr.mxu0 0.0
    %655 = vmatpush1.msra.mxu0 0.0
    %656 = vmatprep.subr.mxu0 0.0
    %657 = vmatpush1.msra.mxu0 0.0
    %658 = vmatprep.mubr.f32.mxu0 0.0
    %659 = vmatmul.mubr.f32.gmra.mrb[0].mxu0 %v592
    %v660 = vpop.f32.mrb[0].mxu0
    %v661 = vadd.f32 %v588, %v660
    %v662 = vpop.f32.mrb[0].mxu0
    %663 = vdwg.mxu0
    %664 = vst [vmem:[#allocation18] sm:$0xff] %v661
    // Predicated region
    $region78: #{_decoder_lstm_forward_impl.1} parent=1 // pred_check
      _
    $region79: #{_decoder_lstm_forward_impl.1} parent=1 // pred_check_branch
      %666 = sbr.rel (0) target = $region81
    $region80: #{_decoder_lstm_forward_impl.1} parent=1 // pred_region
      %s668 = ssub.s32 128, 128
      %669 = vsyncadd [#allocation5], %s668
      %s671 = sshll.u32 [#allocation18], 4
      %s672 = int_to_ptr.vmem [resolvable:$true] %s671
      %674 = dma.vmem_to_hbm [thread:$0]  %s672, 128, %s9, [#allocation5]
    $region81: #{_decoder_lstm_forward_impl.1} parent=1 // pred_fallthru
      _
    // Predicated region
    $region82: #{_decoder_lstm_forward_impl.1} parent=1 // pred_check
      _
    $region83: #{_decoder_lstm_forward_impl.1} parent=1 // pred_check_branch
      %676 = sbr.rel (0) target = $region85
    $region84: #{_decoder_lstm_forward_impl.1} parent=1 // pred_region
      %s678 = ssub.s32 256, 256
      %679 = vsyncadd [#allocation20], %s678
      %s680 = sshll.u32 [#allocation19], 4
      %s681 = int_to_ptr.vmem [resolvable:$true] %s680
      %686 = dma.vmem_to_hbm [thread:$0]  %s681, 256, %s10, [#allocation20], 128, 128, 8
    $region85: #{_decoder_lstm_forward_impl.1} parent=1 // pred_fallthru
      _
    // Predicated region
    $region86: #{_decoder_lstm_forward_impl.1} parent=1 // pred_check
      _
    $region87: #{_decoder_lstm_forward_impl.1} parent=1 // pred_check_branch
      %688 = sbr.rel (0) target = $region89
    $region88: #{_decoder_lstm_forward_impl.1} parent=1 // pred_region
      %s690 = ssub.s32 256, 256
      %691 = vsyncadd [#allocation20], %s690
      %s692 = sshll.u32 [#allocation21], 4
      %s693 = int_to_ptr.vmem [resolvable:$true] %s692
      %698 = dma.vmem_to_hbm [thread:$0]  %s693, 256, %s11, [#allocation20], 128, 128, 8
    $region89: #{_decoder_lstm_forward_impl.1} parent=1 // pred_fallthru
      _
    // Predicated region
    $region90: #{_decoder_lstm_forward_impl.1} parent=1 // pred_check
      _
    $region91: #{_decoder_lstm_forward_impl.1} parent=1 // pred_check_branch
      %700 = sbr.rel (0) target = $region93
    $region92: #{_decoder_lstm_forward_impl.1} parent=1 // pred_region
      %701 = dma.done [#allocation5], 128
    $region93: #{_decoder_lstm_forward_impl.1} parent=1 // pred_fallthru
      _
    // Predicated region
    $region94: #{_decoder_lstm_forward_impl.1} parent=1 // pred_check
      _
    $region95: #{_decoder_lstm_forward_impl.1} parent=1 // pred_check_branch
      %703 = sbr.rel (0) target = $region97
    $region96: #{_decoder_lstm_forward_impl.1} parent=1 // pred_region
      %704 = dma.done [#allocation20], 256
    $region97: #{_decoder_lstm_forward_impl.1} parent=1 // pred_fallthru
      _
    // Predicated region
    $region98: #{_decoder_lstm_forward_impl.1} parent=1 // pred_check
      _
    $region99: #{_decoder_lstm_forward_impl.1} parent=1 // pred_check_branch
      %706 = sbr.rel (0) target = $region101
    $region100: #{_decoder_lstm_forward_impl.1} parent=1 // pred_region
      %707 = dma.done [#allocation20], 256
    $region101: #{_decoder_lstm_forward_impl.1} parent=1 // pred_fallthru
      _
    %708 = vsyncpa [#allocation4], 1
    %709 = vsyncpa [#allocation7], 1
    %710 = vsyncpa [#allocation10], 1
    %711 = vsyncpa [#allocation13], 1
    %712 = vsyncpa [#allocation16], 1
    %713 = vsyncpa [#allocation5], 1
    %714 = vsyncpa [#allocation20], 1

</llo_original>
